<compile_context>
chip_gen: v7x
topology: tpu7x:2x2x1
jax: 0.10.0
libtpu: 0.0.40
codegen_flags: <defaults>
</compile_context>

<pallas_src>
import functools

import jax
import jax.numpy as jnp
import numpy as np
from jax import lax
from jax.experimental import pallas as pl
from jax.experimental.pallas import tpu as pltpu

RELATED_NODES = {0: 'Hips', 1: 'UpLeg', 2: 'Leg', 3: 'Foot', 4: 'Toe', 5: 'UpLeg',
                 6: 'Leg', 7: 'Foot', 8: 'Toe', 9: 'Spine', 10: 'Spine1', 11: 'Spine2',
                 12: 'Neck', 13: 'Head', 14: 'Shoulder', 15: 'Arm', 16: 'ForeArm',
                 17: 'Hand', 18: 'Finger1', 19: 'Finger2', 20: 'Finger3', 21: 'Finger1',
                 22: 'Finger2', 23: 'Finger3', 24: 'Finger1', 25: 'Finger2', 26: 'Finger3',
                 27: 'Finger1', 28: 'Finger2', 29: 'Finger3', 30: 'Finger1', 31: 'Finger2',
                 32: 'Finger3', 33: 'Shoulder', 34: 'Arm', 35: 'ForeArm', 36: 'Hand',
                 37: 'Finger1', 38: 'Finger2', 39: 'Finger3', 40: 'Finger1', 41: 'Finger2',
                 42: 'Finger3', 43: 'Finger1', 44: 'Finger2', 45: 'Finger3', 46: 'Finger1',
                 47: 'Finger2', 48: 'Finger3', 49: 'Finger1', 50: 'Finger2', 51: 'Finger3',
                 52: 'Position'}


# ---------------------------------------------------------------------------
# Pallas kernel: one grid step == one batch tile (BT_tile = B_tile*T rows),
# static in-kernel loop over joint blocks.
#   r_ref  : [BT_tile, n_pad*F_max]   gathered neighbourhood features
#   w_ref  : [n_blk, J_blk*F_max, J_blk*C]  block-diagonal Linear weights
#   b_ref  : [n_blk, 1, J_blk*C]            Linear bias
#   wc_ref : [n_blk, 3*J_blk*C, J_blk*C]    block-diagonal fused Conv1d taps
#   bc_ref : [n_blk, 1, J_blk*C]            Conv1d bias
#   o_ref  : [BT_tile, n_pad*C]
# ---------------------------------------------------------------------------
def _rcb_kernel(r_ref, w_ref, b_ref, wc_ref, bc_ref, o_ref, *, T):
    bt_tile = r_ref.shape[0]
    n_blk, jf, cj = w_ref.shape

    # Reflect-pad row-selection masks; hoisted out of the joint-block loop.
    row = lax.broadcasted_iota(jnp.int32, (bt_tile, cj), 0)
    t_in_seq = row % T
    is_first = t_in_seq == 0          # t == 0     -> reflect uses t = 1
    is_last = t_in_seq == (T - 1)     # t == T-1   -> reflect uses t = T-2

    for jb in range(n_blk):           # static loop, fully unrolled
        # -- Linear + ReLU for J_blk joints at once (block-diagonal weights) --
        r_blk = r_ref[:, jb * jf:(jb + 1) * jf]                       # [BT, JF]
        h = jnp.dot(r_blk.astype(w_ref.dtype), w_ref[jb],
                    preferred_element_type=jnp.float32) + b_ref[jb]
        h = jnp.maximum(h, 0.0)                                       # [BT, CJ]

        # -- reflect-padded time shifts (row rolls + boundary select) --------
        h_dn = jnp.roll(h, 1, axis=0)     # row i <- row i-1
        h_up = jnp.roll(h, -1, axis=0)    # row i <- row i+1
        h_prev = jnp.where(is_first, h_up, h_dn)
        h_next = jnp.where(is_last, h_dn, h_up)

        # -- fused 3-tap Conv1d: one deep-K matmul (K = 3*CJ) -----------------
        h_stk = jnp.concatenate([h_prev, h, h_next], axis=-1)         # [BT, 3CJ]
        out = jnp.dot(h_stk.astype(wc_ref.dtype), wc_ref[jb],
                      preferred_element_type=jnp.float32) + bc_ref[jb]

        # lane-dense, 128-aligned store slab
        o_ref[:, jb * cj:(jb + 1) * cj] = out.astype(o_ref.dtype)


# ---------------------------------------------------------------------------
# One-time parameter prep: block-diagonal packing of per-joint weights into
# J_blk-sized joint blocks + padded gather index table.  Done OUTSIDE hot path.
# ---------------------------------------------------------------------------
def prepare_stacked_params(adjacency_list, params_by_name, c_in,
                           j_blk=None, dtype=np.float32):
    n = len(adjacency_list)
    a_max = max(len(a) for a in adjacency_list)
    f_max = c_in * a_max
    C = int(params_by_name[RELATED_NODES[0]][0].shape[1])
    if j_blk is None:
        j_blk = max(1, 128 // C)              # lane-dense output slabs
    n_blk = -(-n // j_blk)                    # ceil
    n_pad = n_blk * j_blk
    JF, CJ = j_blk * f_max, j_blk * C

    idx = np.zeros((n_pad, a_max), dtype=np.int32)      # padded slots -> node 0
    W_bd = np.zeros((n_blk, JF, CJ), dtype=dtype)        # zero off-blocks
    b_bd = np.zeros((n_blk, 1, CJ), dtype=dtype)
    Wc_bd = np.zeros((n_blk, 3 * CJ, CJ), dtype=dtype)
    bc_bd = np.zeros((n_blk, 1, CJ), dtype=dtype)

    for i, adj in enumerate(adjacency_list):
        name = RELATED_NODES[i]
        W, b, wc, bc = params_by_name[name]
        f_i = c_in * len(adj)
        assert W.shape[0] == f_i, "shared-name joints must have equal adjacency lengths"
        jb, jp = divmod(i, j_blk)
        idx[i, :len(adj)] = np.asarray(adj, dtype=np.int32)
        W_bd[jb, jp * f_max: jp * f_max + f_i, jp * C:(jp + 1) * C] = np.asarray(W)
        b_bd[jb, 0, jp * C:(jp + 1) * C] = np.asarray(b)
        for k in range(3):   # Conv1d taps: rows [0,CJ)->t-1, [CJ,2CJ)->t, [2CJ,3CJ)->t+1
            Wc_bd[jb, k * CJ + jp * C: k * CJ + (jp + 1) * C,
                  jp * C:(jp + 1) * C] = np.asarray(wc[:, :, k]).T     # [out,in]->[in,out]
        bc_bd[jb, 0, jp * C:(jp + 1) * C] = np.asarray(bc)

    return dict(idx=jnp.asarray(idx), W=jnp.asarray(W_bd), b=jnp.asarray(b_bd),
                Wc=jnp.asarray(Wc_bd), bc=jnp.asarray(bc_bd))


def _pick_batch_tile(B, T, target_rows=256):
    """Largest divisor of B whose tile (B_tile*T rows) is <= target and 8-aligned."""
    valid = [d for d in range(1, B + 1)
             if B % d == 0 and d * T <= target_rows and (d * T) % 8 == 0]
    return max(valid) if valid else B


# ---------------------------------------------------------------------------
# Forward: x [B, T, N_nodes, C_in] -> [B, T, num_joints, C_out]
# ---------------------------------------------------------------------------
@functools.partial(jax.jit, static_argnames=("num_joints",))
def restricted_conv_block_forward(x, idx, W_bd, b_bd, Wc_bd, bc_bd, *, num_joints):
    B, T, _, c_in = x.shape
    assert T >= 2, "reflect padding (pad=1) requires T >= 2"
    n_pad, a_max = idx.shape
    f_max = a_max * c_in
    n_blk, JF, CJ = W_bd.shape
    assert n_pad % n_blk == 0
    j_blk = n_pad // n_blk
    assert JF == j_blk * f_max, "prepared params do not match input channel count"
    C = CJ // j_blk
    BT = B * T

    # Single fused gather for all joints; trailing-dim reshape only (no transpose).
    r = x[:, :, idx, :].reshape(BT, n_pad * f_max)

    b_tile = _pick_batch_tile(B, T)
    bt_tile = b_tile * T
    n_bt = B // b_tile

    out_flat = pl.pallas_call(
        functools.partial(_rcb_kernel, T=T),
        out_shape=jax.ShapeDtypeStruct((BT, n_pad * C), jnp.float32),
        grid=(n_bt,),
        in_specs=[
            # activations: new block per batch tile
            pl.BlockSpec((bt_tile, n_pad * f_max), lambda bt: (bt, 0)),
            # weights/biases: constant block index -> DMA'd once, VMEM-resident
            pl.BlockSpec((n_blk, JF, CJ), lambda bt: (0, 0, 0)),
            pl.BlockSpec((n_blk, 1, CJ), lambda bt: (0, 0, 0)),
            pl.BlockSpec((n_blk, 3 * CJ, CJ), lambda bt: (0, 0, 0)),
            pl.BlockSpec((n_blk, 1, CJ), lambda bt: (0, 0, 0)),
        ],
        out_specs=pl.BlockSpec((bt_tile, n_pad * C), lambda bt: (bt, 0)),
        compiler_params=pltpu.CompilerParams(
            dimension_semantics=("parallel",),
            vmem_limit_bytes=32 * 1024 * 1024),
    )(r, W_bd, b_bd, Wc_bd, bc_bd)

    # free reshape into the final layout, then drop the padded joints
    return out_flat.reshape(B, T, n_pad, C)[:, :, :num_joints, :]


# ---------------------------------------------------------------------------
# Pure-JAX reference (same math as the PyTorch forward with stride=1,
# is_transpose=False, kernel_size=3, reflect padding).
# ---------------------------------------------------------------------------
def reference_forward(x, adjacency_list, params_by_name):
    B, T, _, _ = x.shape
    outs = []
    for i, adj in enumerate(adjacency_list):
        W, b, wc, bc = params_by_name[RELATED_NODES[i]]
        r = x[:, :, jnp.asarray(adj), :].reshape(B * T, -1)
        h = jnp.maximum(r @ W + b, 0.0).reshape(B, T, -1)
        hp = jnp.concatenate([h[:, 1:2], h[:, :-1]], axis=1)
        hn = jnp.concatenate([h[:, 1:], h[:, -2:-1]], axis=1)
        o = hp @ wc[:, :, 0].T + h @ wc[:, :, 1].T + hn @ wc[:, :, 2].T + bc
        outs.append(o[:, :, None, :])
    return jnp.concatenate(outs, axis=2)


if __name__ == "__main__":
    B, T, C_in, C_out = 2, 8, 4, 32
    # small skeleton: 9 joints (Hips + left/right leg chains); shared RELATED_NODES
    # names (UpLeg/Leg/Foot/Toe) have equal-length adjacency lists, as required
    # for weight sharing in the PyTorch module.
    adjacency_list = [
        [0, 1, 5],   # 0 Hips
        [0, 1, 2],   # 1 UpLeg
        [1, 2, 3],   # 2 Leg
        [2, 3, 4],   # 3 Foot
        [3, 4],      # 4 Toe
        [0, 5, 6],   # 5 UpLeg
        [5, 6, 7],   # 6 Leg
        [6, 7, 8],   # 7 Foot
        [7, 8],      # 8 Toe
    ]
    N = len(adjacency_list)

    key = jax.random.PRNGKey(0)
    key, xk = jax.random.split(key)
    x = jax.random.normal(xk, (B, T, N, C_in), dtype=jnp.float32)

    # deterministic parameter init (one set per distinct RELATED_NODES name)
    params_by_name = {}
    for i, adj in enumerate(adjacency_list):
        name = RELATED_NODES[i]
        if name in params_by_name:
            continue
        F = C_in * len(adj)
        key, k1, k2, k3, k4 = jax.random.split(key, 5)
        W = 0.1 * jax.random.normal(k1, (F, C_out), dtype=jnp.float32)           # Linear [in,out]
        b = 0.1 * jax.random.normal(k2, (C_out,), dtype=jnp.float32)
        wc = 0.1 * jax.random.normal(k3, (C_out, C_out, 3), dtype=jnp.float32)   # Conv1d [out,in,K]
        bc = 0.1 * jax.random.normal(k4, (C_out,), dtype=jnp.float32)
        params_by_name[name] = (W, b, wc, bc)

    # dtype=jnp.bfloat16 here halves weight traffic on v6e/v7x (relax tolerance).
    stacked = prepare_stacked_params(adjacency_list, params_by_name, C_in,
                                     dtype=np.float32)

    out = restricted_conv_block_forward(
        x, stacked["idx"], stacked["W"], stacked["b"], stacked["Wc"], stacked["bc"],
        num_joints=N)
    out = jax.block_until_ready(out)

    ref = jax.block_until_ready(reference_forward(x, adjacency_list, params_by_name))
    assert out.shape == (B, T, N, C_out), out.shape
    assert jnp.allclose(out, ref, atol=1e-4, rtol=1e-4), "Pallas output mismatch"

    print("KERNEL_OK")
</pallas_src>

<mosaic_0001>
module attributes {stable_mosaic.version = 11 : i64} {
  func.func @_rcb_kernel(%arg0: i32, %arg1: memref<16x144xf32, #tpu.memory_space<vmem>>, %arg2: memref<3x48x128xf32, #tpu.memory_space<vmem>>, %arg3: memref<3x1x128xf32, #tpu.memory_space<vmem>>, %arg4: memref<3x384x128xf32, #tpu.memory_space<vmem>>, %arg5: memref<3x1x128xf32, #tpu.memory_space<vmem>>, %arg6: memref<16x384xf32, #tpu.memory_space<vmem>>) attributes {dimension_semantics = [#tpu.dimension_semantics<parallel>], iteration_bounds = array<i64: 1>, scalar_prefetch = 0 : i64, scratch_operands = 0 : i64, tpu.core_type = #tpu.core_type<tc>, window_params = [{transform_indices = @transform_0, window_bounds = array<i64: 16, 144>}, {pipeline_mode = #tpu.pipeline_mode<synchronous>, transform_indices = @transform_1, window_bounds = array<i64: 3, 48, 128>}, {pipeline_mode = #tpu.pipeline_mode<synchronous>, transform_indices = @transform_2, window_bounds = array<i64: 3, 1, 128>}, {pipeline_mode = #tpu.pipeline_mode<synchronous>, transform_indices = @transform_3, window_bounds = array<i64: 3, 384, 128>}, {pipeline_mode = #tpu.pipeline_mode<synchronous>, transform_indices = @transform_4, window_bounds = array<i64: 3, 1, 128>}, {transform_indices = @transform_5, window_bounds = array<i64: 16, 384>}]} {
    %0 = tpu.iota {dimensions = array<i32: 0>} : vector<16x128xi32>
    %c8_i32 = arith.constant 8 : i32
    %c0_i32 = arith.constant 0 : i32
    %1 = arith.cmpi eq, %c8_i32, %c0_i32 : i32
    %c1_i32 = arith.constant 1 : i32
    %2 = arith.select %1, %c1_i32, %c8_i32 : i32
    %3 = vector.broadcast %2 : i32 to vector<16x128xi32>
    %4 = arith.remsi %0, %3 : vector<16x128xi32>
    %c0_i32_0 = arith.constant 0 : i32
    %5 = vector.broadcast %c0_i32_0 : i32 to vector<16x128xi32>
    %6 = arith.cmpi ne, %4, %5 : vector<16x128xi32>
    %c0_i32_1 = arith.constant 0 : i32
    %7 = vector.broadcast %c0_i32_1 : i32 to vector<16x128xi32>
    %8 = arith.cmpi slt, %4, %7 : vector<16x128xi32>
    %c0_i32_2 = arith.constant 0 : i32
    %9 = arith.cmpi slt, %2, %c0_i32_2 : i32
    %10 = vector.broadcast %9 : i1 to vector<16x128xi1>
    %11 = vector.broadcast %10 : vector<16x128xi1> to vector<16x128xi1>
    %12 = arith.xori %8, %11 : vector<16x128xi1>
    %13 = arith.andi %12, %6 : vector<16x128xi1>
    %14 = vector.broadcast %2 : i32 to vector<16x128xi32>
    %15 = arith.addi %4, %14 : vector<16x128xi32>
    %16 = arith.select %13, %15, %4 : vector<16x128xi1>, vector<16x128xi32>
    %c0_i32_3 = arith.constant 0 : i32
    %17 = vector.broadcast %c0_i32_3 : i32 to vector<16x128xi32>
    %18 = arith.cmpi eq, %16, %17 : vector<16x128xi32>
    %c7_i32 = arith.constant 7 : i32
    %19 = vector.broadcast %c7_i32 : i32 to vector<16x128xi32>
    %20 = arith.cmpi eq, %16, %19 : vector<16x128xi32>
    %c0 = arith.constant 0 : index
    %c0_4 = arith.constant 0 : index
    %21 = vector.load %arg1[%c0, %c0_4] : memref<16x144xf32, #tpu.memory_space<vmem>>, vector<16x48xf32>
    %c0_5 = arith.constant 0 : index
    %c0_6 = arith.constant 0 : index
    %c0_7 = arith.constant 0 : index
    %22 = vector.load %arg2[%c0_5, %c0_6, %c0_7] : memref<3x48x128xf32, #tpu.memory_space<vmem>>, vector<1x48x128xf32>
    %23 = vector.shape_cast %22 : vector<1x48x128xf32> to vector<48x128xf32>
    %cst = arith.constant dense<0.000000e+00> : vector<16x128xf32>
    %24 = tpu.matmul %21, %23, %cst {dimension_numbers = #tpu.dot_dimension_numbers<[1], [0], [0], [1], [0, 0, 1, 1], [], []>} : vector<16x48xf32>, vector<48x128xf32>, vector<16x128xf32> -> vector<16x128xf32>
    %c0_8 = arith.constant 0 : index
    %c0_9 = arith.constant 0 : index
    %c0_10 = arith.constant 0 : index
    %25 = vector.load %arg3[%c0_8, %c0_9, %c0_10] : memref<3x1x128xf32, #tpu.memory_space<vmem>>, vector<1x1x128xf32>
    %26 = vector.shape_cast %25 : vector<1x1x128xf32> to vector<1x128xf32>
    %27 = vector.broadcast %26 : vector<1x128xf32> to vector<16x128xf32>
    %28 = arith.addf %24, %27 : vector<16x128xf32>
    %cst_11 = arith.constant 0.000000e+00 : f32
    %29 = vector.broadcast %cst_11 : f32 to vector<16x128xf32>
    %30 = arith.maximumf %28, %29 : vector<16x128xf32>
    %31 = vector.extract_strided_slice %30 {offsets = [15, 0], sizes = [1, 128], strides = [1, 1]} : vector<16x128xf32> to vector<1x128xf32>
    %32 = vector.extract_strided_slice %30 {offsets = [0, 0], sizes = [15, 128], strides = [1, 1]} : vector<16x128xf32> to vector<15x128xf32>
    %33 = tpu.concatenate %31, %32 in 0 : vector<1x128xf32>, vector<15x128xf32> -> vector<16x128xf32>
    %34 = vector.extract_strided_slice %30 {offsets = [1, 0], sizes = [15, 128], strides = [1, 1]} : vector<16x128xf32> to vector<15x128xf32>
    %35 = vector.extract_strided_slice %30 {offsets = [0, 0], sizes = [1, 128], strides = [1, 1]} : vector<16x128xf32> to vector<1x128xf32>
    %36 = tpu.concatenate %34, %35 in 0 : vector<15x128xf32>, vector<1x128xf32> -> vector<16x128xf32>
    %37 = arith.select %18, %36, %33 : vector<16x128xi1>, vector<16x128xf32>
    %38 = arith.select %20, %33, %36 : vector<16x128xi1>, vector<16x128xf32>
    %39 = tpu.concatenate %37, %30, %38 in 1 : vector<16x128xf32>, vector<16x128xf32>, vector<16x128xf32> -> vector<16x384xf32>
    %c0_12 = arith.constant 0 : index
    %c0_13 = arith.constant 0 : index
    %c0_14 = arith.constant 0 : index
    %40 = vector.load %arg4[%c0_12, %c0_13, %c0_14] : memref<3x384x128xf32, #tpu.memory_space<vmem>>, vector<1x384x128xf32>
    %41 = vector.shape_cast %40 : vector<1x384x128xf32> to vector<384x128xf32>
    %cst_15 = arith.constant dense<0.000000e+00> : vector<16x128xf32>
    %42 = tpu.matmul %39, %41, %cst_15 {dimension_numbers = #tpu.dot_dimension_numbers<[1], [0], [0], [1], [0, 0, 1, 1], [], []>} : vector<16x384xf32>, vector<384x128xf32>, vector<16x128xf32> -> vector<16x128xf32>
    %c0_16 = arith.constant 0 : index
    %c0_17 = arith.constant 0 : index
    %c0_18 = arith.constant 0 : index
    %43 = vector.load %arg5[%c0_16, %c0_17, %c0_18] : memref<3x1x128xf32, #tpu.memory_space<vmem>>, vector<1x1x128xf32>
    %44 = vector.shape_cast %43 : vector<1x1x128xf32> to vector<1x128xf32>
    %45 = vector.broadcast %44 : vector<1x128xf32> to vector<16x128xf32>
    %46 = arith.addf %42, %45 : vector<16x128xf32>
    %c0_19 = arith.constant 0 : index
    %c0_20 = arith.constant 0 : index
    %47 = vector.load %arg6[%c0_19, %c0_20] : memref<16x384xf32, #tpu.memory_space<vmem>>, vector<16x128xf32>
    tpu.vector_store %arg6[%c0_19, %c0_20], %46 {strides = array<i32>} : memref<16x384xf32, #tpu.memory_space<vmem>>, vector<16x128xf32>,
    %c0_21 = arith.constant 0 : index
    %c48 = arith.constant 48 : index
    %48 = vector.load %arg1[%c0_21, %c48] : memref<16x144xf32, #tpu.memory_space<vmem>>, vector<16x48xf32>
    %c1 = arith.constant 1 : index
    %c0_22 = arith.constant 0 : index
    %c0_23 = arith.constant 0 : index
    %49 = vector.load %arg2[%c1, %c0_22, %c0_23] : memref<3x48x128xf32, #tpu.memory_space<vmem>>, vector<1x48x128xf32>
    %50 = vector.shape_cast %49 : vector<1x48x128xf32> to vector<48x128xf32>
    %cst_24 = arith.constant dense<0.000000e+00> : vector<16x128xf32>
    %51 = tpu.matmul %48, %50, %cst_24 {dimension_numbers = #tpu.dot_dimension_numbers<[1], [0], [0], [1], [0, 0, 1, 1], [], []>} : vector<16x48xf32>, vector<48x128xf32>, vector<16x128xf32> -> vector<16x128xf32>
    %c1_25 = arith.constant 1 : index
    %c0_26 = arith.constant 0 : index
    %c0_27 = arith.constant 0 : index
    %52 = vector.load %arg3[%c1_25, %c0_26, %c0_27] : memref<3x1x128xf32, #tpu.memory_space<vmem>>, vector<1x1x128xf32>
    %53 = vector.shape_cast %52 : vector<1x1x128xf32> to vector<1x128xf32>
    %54 = vector.broadcast %53 : vector<1x128xf32> to vector<16x128xf32>
    %55 = arith.addf %51, %54 : vector<16x128xf32>
    %cst_28 = arith.constant 0.000000e+00 : f32
    %56 = vector.broadcast %cst_28 : f32 to vector<16x128xf32>
    %57 = arith.maximumf %55, %56 : vector<16x128xf32>
    %58 = vector.extract_strided_slice %57 {offsets = [15, 0], sizes = [1, 128], strides = [1, 1]} : vector<16x128xf32> to vector<1x128xf32>
    %59 = vector.extract_strided_slice %57 {offsets = [0, 0], sizes = [15, 128], strides = [1, 1]} : vector<16x128xf32> to vector<15x128xf32>
    %60 = tpu.concatenate %58, %59 in 0 : vector<1x128xf32>, vector<15x128xf32> -> vector<16x128xf32>
    %61 = vector.extract_strided_slice %57 {offsets = [1, 0], sizes = [15, 128], strides = [1, 1]} : vector<16x128xf32> to vector<15x128xf32>
    %62 = vector.extract_strided_slice %57 {offsets = [0, 0], sizes = [1, 128], strides = [1, 1]} : vector<16x128xf32> to vector<1x128xf32>
    %63 = tpu.concatenate %61, %62 in 0 : vector<15x128xf32>, vector<1x128xf32> -> vector<16x128xf32>
    %64 = arith.select %18, %63, %60 : vector<16x128xi1>, vector<16x128xf32>
    %65 = arith.select %20, %60, %63 : vector<16x128xi1>, vector<16x128xf32>
    %66 = tpu.concatenate %64, %57, %65 in 1 : vector<16x128xf32>, vector<16x128xf32>, vector<16x128xf32> -> vector<16x384xf32>
    %c1_29 = arith.constant 1 : index
    %c0_30 = arith.constant 0 : index
    %c0_31 = arith.constant 0 : index
    %67 = vector.load %arg4[%c1_29, %c0_30, %c0_31] : memref<3x384x128xf32, #tpu.memory_space<vmem>>, vector<1x384x128xf32>
    %68 = vector.shape_cast %67 : vector<1x384x128xf32> to vector<384x128xf32>
    %cst_32 = arith.constant dense<0.000000e+00> : vector<16x128xf32>
    %69 = tpu.matmul %66, %68, %cst_32 {dimension_numbers = #tpu.dot_dimension_numbers<[1], [0], [0], [1], [0, 0, 1, 1], [], []>} : vector<16x384xf32>, vector<384x128xf32>, vector<16x128xf32> -> vector<16x128xf32>
    %c1_33 = arith.constant 1 : index
    %c0_34 = arith.constant 0 : index
    %c0_35 = arith.constant 0 : index
    %70 = vector.load %arg5[%c1_33, %c0_34, %c0_35] : memref<3x1x128xf32, #tpu.memory_space<vmem>>, vector<1x1x128xf32>
    %71 = vector.shape_cast %70 : vector<1x1x128xf32> to vector<1x128xf32>
    %72 = vector.broadcast %71 : vector<1x128xf32> to vector<16x128xf32>
    %73 = arith.addf %69, %72 : vector<16x128xf32>
    %c0_36 = arith.constant 0 : index
    %c128 = arith.constant 128 : index
    %74 = vector.load %arg6[%c0_36, %c128] : memref<16x384xf32, #tpu.memory_space<vmem>>, vector<16x128xf32>
    tpu.vector_store %arg6[%c0_36, %c128], %73 {strides = array<i32>} : memref<16x384xf32, #tpu.memory_space<vmem>>, vector<16x128xf32>,
    %c0_37 = arith.constant 0 : index
    %c96 = arith.constant 96 : index
    %75 = vector.load %arg1[%c0_37, %c96] : memref<16x144xf32, #tpu.memory_space<vmem>>, vector<16x48xf32>
    %c2 = arith.constant 2 : index
    %c0_38 = arith.constant 0 : index
    %c0_39 = arith.constant 0 : index
    %76 = vector.load %arg2[%c2, %c0_38, %c0_39] : memref<3x48x128xf32, #tpu.memory_space<vmem>>, vector<1x48x128xf32>
    %77 = vector.shape_cast %76 : vector<1x48x128xf32> to vector<48x128xf32>
    %cst_40 = arith.constant dense<0.000000e+00> : vector<16x128xf32>
    %78 = tpu.matmul %75, %77, %cst_40 {dimension_numbers = #tpu.dot_dimension_numbers<[1], [0], [0], [1], [0, 0, 1, 1], [], []>} : vector<16x48xf32>, vector<48x128xf32>, vector<16x128xf32> -> vector<16x128xf32>
    %c2_41 = arith.constant 2 : index
    %c0_42 = arith.constant 0 : index
    %c0_43 = arith.constant 0 : index
    %79 = vector.load %arg3[%c2_41, %c0_42, %c0_43] : memref<3x1x128xf32, #tpu.memory_space<vmem>>, vector<1x1x128xf32>
    %80 = vector.shape_cast %79 : vector<1x1x128xf32> to vector<1x128xf32>
    %81 = vector.broadcast %80 : vector<1x128xf32> to vector<16x128xf32>
    %82 = arith.addf %78, %81 : vector<16x128xf32>
    %cst_44 = arith.constant 0.000000e+00 : f32
    %83 = vector.broadcast %cst_44 : f32 to vector<16x128xf32>
    %84 = arith.maximumf %82, %83 : vector<16x128xf32>
    %85 = vector.extract_strided_slice %84 {offsets = [15, 0], sizes = [1, 128], strides = [1, 1]} : vector<16x128xf32> to vector<1x128xf32>
    %86 = vector.extract_strided_slice %84 {offsets = [0, 0], sizes = [15, 128], strides = [1, 1]} : vector<16x128xf32> to vector<15x128xf32>
    %87 = tpu.concatenate %85, %86 in 0 : vector<1x128xf32>, vector<15x128xf32> -> vector<16x128xf32>
    %88 = vector.extract_strided_slice %84 {offsets = [1, 0], sizes = [15, 128], strides = [1, 1]} : vector<16x128xf32> to vector<15x128xf32>
    %89 = vector.extract_strided_slice %84 {offsets = [0, 0], sizes = [1, 128], strides = [1, 1]} : vector<16x128xf32> to vector<1x128xf32>
    %90 = tpu.concatenate %88, %89 in 0 : vector<15x128xf32>, vector<1x128xf32> -> vector<16x128xf32>
    %91 = arith.select %18, %90, %87 : vector<16x128xi1>, vector<16x128xf32>
    %92 = arith.select %20, %87, %90 : vector<16x128xi1>, vector<16x128xf32>
    %93 = tpu.concatenate %91, %84, %92 in 1 : vector<16x128xf32>, vector<16x128xf32>, vector<16x128xf32> -> vector<16x384xf32>
    %c2_45 = arith.constant 2 : index
    %c0_46 = arith.constant 0 : index
    %c0_47 = arith.constant 0 : index
    %94 = vector.load %arg4[%c2_45, %c0_46, %c0_47] : memref<3x384x128xf32, #tpu.memory_space<vmem>>, vector<1x384x128xf32>
    %95 = vector.shape_cast %94 : vector<1x384x128xf32> to vector<384x128xf32>
    %cst_48 = arith.constant dense<0.000000e+00> : vector<16x128xf32>
    %96 = tpu.matmul %93, %95, %cst_48 {dimension_numbers = #tpu.dot_dimension_numbers<[1], [0], [0], [1], [0, 0, 1, 1], [], []>} : vector<16x384xf32>, vector<384x128xf32>, vector<16x128xf32> -> vector<16x128xf32>
    %c2_49 = arith.constant 2 : index
    %c0_50 = arith.constant 0 : index
    %c0_51 = arith.constant 0 : index
    %97 = vector.load %arg5[%c2_49, %c0_50, %c0_51] : memref<3x1x128xf32, #tpu.memory_space<vmem>>, vector<1x1x128xf32>
    %98 = vector.shape_cast %97 : vector<1x1x128xf32> to vector<1x128xf32>
    %99 = vector.broadcast %98 : vector<1x128xf32> to vector<16x128xf32>
    %100 = arith.addf %96, %99 : vector<16x128xf32>
    %c0_52 = arith.constant 0 : index
    %c256 = arith.constant 256 : index
    %101 = vector.load %arg6[%c0_52, %c256] : memref<16x384xf32, #tpu.memory_space<vmem>>, vector<16x128xf32>
    tpu.vector_store %arg6[%c0_52, %c256], %100 {strides = array<i32>} : memref<16x384xf32, #tpu.memory_space<vmem>>, vector<16x128xf32>,
    return
  }
  func.func @transform_0(%arg0: i32) -> (i32, i32) {
    %c0_i32 = arith.constant 0 : i32
    %c0_i32_0 = arith.constant 0 : i32
    return %arg0, %c0_i32 : i32, i32
  }
  func.func @transform_1(%arg0: i32) -> (i32, i32, i32) {
    %c0_i32 = arith.constant 0 : i32
    %c0_i32_0 = arith.constant 0 : i32
    %c0_i32_1 = arith.constant 0 : i32
    %c0_i32_2 = arith.constant 0 : i32
    return %c0_i32, %c0_i32_0, %c0_i32_1 : i32, i32, i32
  }
  func.func @transform_2(%arg0: i32) -> (i32, i32, i32) {
    %c0_i32 = arith.constant 0 : i32
    %c0_i32_0 = arith.constant 0 : i32
    %c0_i32_1 = arith.constant 0 : i32
    %c0_i32_2 = arith.constant 0 : i32
    return %c0_i32, %c0_i32_0, %c0_i32_1 : i32, i32, i32
  }
  func.func @transform_3(%arg0: i32) -> (i32, i32, i32) {
    %c0_i32 = arith.constant 0 : i32
    %c0_i32_0 = arith.constant 0 : i32
    %c0_i32_1 = arith.constant 0 : i32
    %c0_i32_2 = arith.constant 0 : i32
    return %c0_i32, %c0_i32_0, %c0_i32_1 : i32, i32, i32
  }
  func.func @transform_4(%arg0: i32) -> (i32, i32, i32) {
    %c0_i32 = arith.constant 0 : i32
    %c0_i32_0 = arith.constant 0 : i32
    %c0_i32_1 = arith.constant 0 : i32
    %c0_i32_2 = arith.constant 0 : i32
    return %c0_i32, %c0_i32_0, %c0_i32_1 : i32, i32, i32
  }
  func.func @transform_5(%arg0: i32) -> (i32, i32) {
    %c0_i32 = arith.constant 0 : i32
    %c0_i32_0 = arith.constant 0 : i32
    return %arg0, %c0_i32 : i32, i32
  }
}

</mosaic_0001>

<llo_original>
// kernel: restricted_conv_block_forward.1
$region0: #{restricted_conv_block_forward.1}
  #allocation0 [shape = 'u32[]', space=smem, size = 0x4, offset = 0x4, fixed_abs, tag = 'smem constant byte address 0x4 - core index']
  #allocation1 [shape = 'u32[144,128]{1,0:T(1,128)}', space=vmem, size = 0x12000, scoped, tag = 'internal scratch']
  %s0 = inlined_call_operand.vmem [shape: f32[16,144], index: 0, kind: input, shape index: {}]
  %s1 = inlined_call_operand.vmem [shape: f32[3,48,128], index: 1, kind: input, shape index: {}]
  %s2 = inlined_call_operand.vmem [shape: f32[3,1,128], index: 2, kind: input, shape index: {}]
  %s3 = inlined_call_operand.vmem [shape: f32[3,384,128], index: 3, kind: input, shape index: {}]
  %s4 = inlined_call_operand.vmem [shape: f32[3,1,128], index: 4, kind: input, shape index: {}]
  %s5 = inlined_call_operand.vmem [shape: f32[16,384], index: 5, kind: output, shape index: {}]
  %s6 = sld [smem:[#allocation0]]
  $region30: #{restricted_conv_block_forward.1} parent=0
    _
  %s8 = ssub.s32 1, %s6
  %s9 = scalar_select 0, %s8, %s6
  // Predicated region
  $region2: #{restricted_conv_block_forward.1} parent=0 // pred_check
    _
  $region3: #{restricted_conv_block_forward.1} parent=0 // pred_check_branch
    %11 = sbr.rel (0) target = $region5
  $region4: #{restricted_conv_block_forward.1} parent=0 // pred_region
    _
  $region5: #{restricted_conv_block_forward.1} parent=0 // pred_fallthru
    _
  // Predicated region
  $region6: #{restricted_conv_block_forward.1} parent=0 // pred_check
    _
  $region7: #{restricted_conv_block_forward.1} parent=0 // pred_check_branch
    %13 = sbr.rel (0) target = $region9
  $region8: #{restricted_conv_block_forward.1} parent=0 // pred_region
    _
  $region9: #{restricted_conv_block_forward.1} parent=0 // pred_fallthru
    _
  // Predicated region
  $region10: #{restricted_conv_block_forward.1} parent=0 // pred_check
    _
  $region11: #{restricted_conv_block_forward.1} parent=0 // pred_check_branch
    %15 = sbr.rel (0) target = $region13
  $region12: #{restricted_conv_block_forward.1} parent=0 // pred_region
    _
  $region13: #{restricted_conv_block_forward.1} parent=0 // pred_fallthru
    _
  // Predicated region
  $region14: #{restricted_conv_block_forward.1} parent=0 // pred_check
    _
  $region15: #{restricted_conv_block_forward.1} parent=0 // pred_check_branch
    %17 = sbr.rel (0) target = $region17
  $region16: #{restricted_conv_block_forward.1} parent=0 // pred_region
    _
  $region17: #{restricted_conv_block_forward.1} parent=0 // pred_fallthru
    _
  // Predicated region
  $region18: #{restricted_conv_block_forward.1} parent=0 // pred_check
    _
  $region19: #{restricted_conv_block_forward.1} parent=0 // pred_check_branch
    %19 = sbr.rel (0) target = $region21
  $region20: #{restricted_conv_block_forward.1} parent=0 // pred_region
    _
  $region21: #{restricted_conv_block_forward.1} parent=0 // pred_fallthru
    _
  %v20 = vlaneseq
  %v21 = vshrl.u32 %v20, 7
  %v22 = vadd.s32 %v21, 8
  %vm23 = vcmp.lt.s32.totalorder %v21, 0
  %v24 = vsub.s32 0, %v21
  %v25 = vsel %vm23, %v24, %v21
  %v26 = vshrl.u32 %v25, 3
  %v27 = vand.u32 %v25, 7
  %v28 = vsub.s32 0, %v27
  %v29 = vsel %vm23, %v28, %v27
  %vm30 = vcmp.lt.s32.totalorder %v22, 0
  %v31 = vsub.s32 0, %v22
  %v32 = vsel %vm30, %v31, %v22
  %v33 = vshrl.u32 %v32, 3
  %v34 = vand.u32 %v32, 7
  %v35 = vsub.s32 0, %v34
  %v36 = vsel %vm30, %v35, %v34
  %vm37 = vcmp.ne.s32.totalorder %v29, 0
  %vm38 = vcmp.ne.s32.totalorder %v36, 0
  %vm39 = vcmp.lt.s32.totalorder %v29, 0
  %vm40 = vcmp.lt.s32.totalorder %v36, 0
  %vm41 = vmand %vm39, %vm37
  %vm42 = vmand %vm40, %vm38
  %v43 = vadd.s32 %v29, 8
  %v44 = vadd.s32 %v36, 8
  %v45 = vsel %vm41, %v43, %v29
  %v46 = vsel %vm42, %v44, %v36
  %vm47 = vcmp.eq.s32.totalorder %v45, 0
  %vm48 = vcmp.eq.s32.totalorder %v46, 0
  %vm49 = vcmp.eq.s32.totalorder %v45, 7
  %vm50 = vcmp.eq.s32.totalorder %v46, 7
  %v51 = vld [vmem:[%s0] sm:$0xff]
  %v52 = vld [vmem:[%s0 + $0x10] sm:$0xff]
  %v53 = vld [vmem:[%s1] sm:$0xff]
  %v54 = vld [vmem:[%s1 + $0x8] sm:$0xff]
  %v55 = vld [vmem:[%s1 + $0x10] sm:$0xff]
  %v56 = vld [vmem:[%s1 + $0x18] sm:$0xff]
  %v57 = vld [vmem:[%s1 + $0x20] sm:$0xff]
  %v58 = vld [vmem:[%s1 + $0x28] sm:$0xff]
  %v59 = vld [vmem:[%s2] sm:$0x1]
  %v61 = vlaneseq
  %v62 = vshrl.u32 %v61, 7
  %v63 = vsub.s32 0, %v62
  %v64 = vrot.slane %v59, %v63
  %vm66 = vcmask 392192
  %v68 = vsel %vm66, %v51, 0
  %v71 = vsel %vm66, %v52, 0
  %73 = vmatprep.subr.mxu0 0.0
  %74 = vmatpush1.msra.mxu0 %v53
  %75 = vmatprep.subr.mxu0 0.0
  %76 = vmatpush1.msra.mxu0 %v54
  %77 = vmatprep.subr.mxu0 0.0
  %78 = vmatpush1.msra.mxu0 %v55
  %79 = vmatprep.subr.mxu0 0.0
  %80 = vmatpush1.msra.mxu0 %v56
  %81 = vmatprep.subr.mxu0 0.0
  %82 = vmatpush1.msra.mxu0 %v57
  %83 = vmatprep.subr.mxu0 0.0
  %84 = vmatpush1.msra.mxu0 %v58
  %85 = vmatprep.subr.mxu0 0.0
  %86 = vmatpush1.msra.mxu0 0.0
  %87 = vmatprep.subr.mxu0 0.0
  %88 = vmatpush1.msra.mxu0 0.0
  %89 = vmatprep.subr.mxu0 0.0
  %90 = vmatpush1.msra.mxu0 0.0
  %91 = vmatprep.subr.mxu0 0.0
  %92 = vmatpush1.msra.mxu0 0.0
  %93 = vmatprep.subr.mxu0 0.0
  %94 = vmatpush1.msra.mxu0 0.0
  %95 = vmatprep.subr.mxu0 0.0
  %96 = vmatpush1.msra.mxu0 0.0
  %97 = vmatprep.subr.mxu0 0.0
  %98 = vmatpush1.msra.mxu0 0.0
  %99 = vmatprep.subr.mxu0 0.0
  %100 = vmatpush1.msra.mxu0 0.0
  %101 = vmatprep.subr.mxu0 0.0
  %102 = vmatpush1.msra.mxu0 0.0
  %103 = vmatprep.subr.mxu0 0.0
  %104 = vmatpush1.msra.mxu0 0.0
  %105 = vmatprep.subr.mxu0 0.0
  %106 = vmatpush1.msra.mxu0 0.0
  %107 = vmatprep.subr.mxu0 0.0
  %108 = vmatpush1.msra.mxu0 0.0
  %109 = vmatprep.subr.mxu0 0.0
  %110 = vmatpush1.msra.mxu0 0.0
  %111 = vmatprep.subr.mxu0 0.0
  %112 = vmatpush1.msra.mxu0 0.0
  %113 = vmatprep.subr.mxu0 0.0
  %114 = vmatpush1.msra.mxu0 0.0
  %115 = vmatprep.subr.mxu0 0.0
  %116 = vmatpush1.msra.mxu0 0.0
  %117 = vmatprep.subr.mxu0 0.0
  %118 = vmatpush1.msra.mxu0 0.0
  %119 = vmatprep.subr.mxu0 0.0
  %120 = vmatpush1.msra.mxu0 0.0
  %121 = vmatprep.subr.mxu0 0.0
  %122 = vmatpush1.msra.mxu0 0.0
  %123 = vmatprep.subr.mxu0 0.0
  %124 = vmatpush1.msra.mxu0 0.0
  %125 = vmatprep.subr.mxu0 0.0
  %126 = vmatpush1.msra.mxu0 0.0
  %127 = vmatprep.subr.mxu0 0.0
  %128 = vmatpush1.msra.mxu0 0.0
  %129 = vmatprep.subr.mxu0 0.0
  %130 = vmatpush1.msra.mxu0 0.0
  %131 = vmatprep.subr.mxu0 0.0
  %132 = vmatpush1.msra.mxu0 0.0
  %133 = vmatprep.subr.mxu0 0.0
  %134 = vmatpush1.msra.mxu0 0.0
  %135 = vmatprep.subr.mxu0 0.0
  %136 = vmatpush1.msra.mxu0 0.0
  %137 = vmatprep.mubr.f32.mxu0 0.0
  %138 = vmatmul.mubr.f32.gmra.mrb[0].mxu0 %v68
  %v139 = vpop.f32.mrb[0].mxu0
  %v140 = vadd.f32 %v64, %v139
  %v141 = vpop.f32.mrb[0].mxu0
  %142 = vmatprep.mubr.f32.mxu0 0.0
  %143 = vmatmul.mubr.f32.gmra.mrb[0].mxu0 %v71
  %v144 = vpop.f32.mrb[0].mxu0
  %v145 = vadd.f32 %v64, %v144
  %v146 = vpop.f32.mrb[0].mxu0
  %147 = vdwg.mxu0
  %v148 = vmax.f32 %v140, 0.0
  %v149 = vmax.f32 %v145, 0.0
  %v151 = vrot.slane %v149, 7
  %vm154 = vcmask 1040384
  %v155 = vrot.slane %v148, 7
  %v156 = vsel %vm154, %v155, %v151
  %v159 = vsel %vm154, %v151, %v155
  %vm160 = vcmask 1046528
  %v161 = vrot.slane %v148, 1
  %v162 = vrot.slane %v149, 1
  %v163 = vsel %vm160, %v161, %v162
  %v167 = vsel %vm160, %v162, %v161
  %v168 = vsel %vm47, %v163, %v159
  %v169 = vsel %vm48, %v167, %v156
  %v170 = vsel %vm49, %v159, %v163
  %v171 = vsel %vm50, %v156, %v167
  %v172 = vld [vmem:[%s3] sm:$0xff]
  %v173 = vld [vmem:[%s3 + $0x8] sm:$0xff]
  %v174 = vld [vmem:[%s3 + $0x10] sm:$0xff]
  %v175 = vld [vmem:[%s3 + $0x18] sm:$0xff]
  %v176 = vld [vmem:[%s3 + $0x20] sm:$0xff]
  %v177 = vld [vmem:[%s3 + $0x28] sm:$0xff]
  %v178 = vld [vmem:[%s3 + $0x30] sm:$0xff]
  %v179 = vld [vmem:[%s3 + $0x38] sm:$0xff]
  %v180 = vld [vmem:[%s3 + $0x40] sm:$0xff]
  %v181 = vld [vmem:[%s3 + $0x48] sm:$0xff]
  %v182 = vld [vmem:[%s3 + $0x50] sm:$0xff]
  %v183 = vld [vmem:[%s3 + $0x58] sm:$0xff]
  %v184 = vld [vmem:[%s3 + $0x60] sm:$0xff]
  %v185 = vld [vmem:[%s3 + $0x68] sm:$0xff]
  %v186 = vld [vmem:[%s3 + $0x70] sm:$0xff]
  %v187 = vld [vmem:[%s3 + $0x78] sm:$0xff]
  %v188 = vld [vmem:[%s3 + $0x80] sm:$0xff]
  %v189 = vld [vmem:[%s3 + $0x88] sm:$0xff]
  %v190 = vld [vmem:[%s3 + $0x90] sm:$0xff]
  %v191 = vld [vmem:[%s3 + $0x98] sm:$0xff]
  %v192 = vld [vmem:[%s3 + $0xa0] sm:$0xff]
  %v193 = vld [vmem:[%s3 + $0xa8] sm:$0xff]
  %v194 = vld [vmem:[%s3 + $0xb0] sm:$0xff]
  %v195 = vld [vmem:[%s3 + $0xb8] sm:$0xff]
  %v196 = vld [vmem:[%s3 + $0xc0] sm:$0xff]
  %v197 = vld [vmem:[%s3 + $0xc8] sm:$0xff]
  %v198 = vld [vmem:[%s3 + $0xd0] sm:$0xff]
  %v199 = vld [vmem:[%s3 + $0xd8] sm:$0xff]
  %v200 = vld [vmem:[%s3 + $0xe0] sm:$0xff]
  %v201 = vld [vmem:[%s3 + $0xe8] sm:$0xff]
  %v202 = vld [vmem:[%s3 + $0xf0] sm:$0xff]
  %v203 = vld [vmem:[%s3 + $0xf8] sm:$0xff]
  %v204 = vld [vmem:[%s3 + $0x100] sm:$0xff]
  %v205 = vld [vmem:[%s3 + $0x108] sm:$0xff]
  %v206 = vld [vmem:[%s3 + $0x110] sm:$0xff]
  %v207 = vld [vmem:[%s3 + $0x118] sm:$0xff]
  %v208 = vld [vmem:[%s3 + $0x120] sm:$0xff]
  %v209 = vld [vmem:[%s3 + $0x128] sm:$0xff]
  %v210 = vld [vmem:[%s3 + $0x130] sm:$0xff]
  %v211 = vld [vmem:[%s3 + $0x138] sm:$0xff]
  %v212 = vld [vmem:[%s3 + $0x140] sm:$0xff]
  %v213 = vld [vmem:[%s3 + $0x148] sm:$0xff]
  %v214 = vld [vmem:[%s3 + $0x150] sm:$0xff]
  %v215 = vld [vmem:[%s3 + $0x158] sm:$0xff]
  %v216 = vld [vmem:[%s3 + $0x160] sm:$0xff]
  %v217 = vld [vmem:[%s3 + $0x168] sm:$0xff]
  %v218 = vld [vmem:[%s3 + $0x170] sm:$0xff]
  %v219 = vld [vmem:[%s3 + $0x178] sm:$0xff]
  %v220 = vld [vmem:[%s4] sm:$0x1]
  %v222 = vlaneseq
  %v223 = vshrl.u32 %v222, 7
  %v224 = vsub.s32 0, %v223
  %v225 = vrot.slane %v220, %v224
  %227 = vmatprep.subr.mxu0 0.0
  %228 = vmatpush1.msra.mxu0 %v172
  %229 = vmatprep.subr.mxu0 0.0
  %230 = vmatpush1.msra.mxu0 %v173
  %231 = vmatprep.subr.mxu0 0.0
  %232 = vmatpush1.msra.mxu0 %v174
  %233 = vmatprep.subr.mxu0 0.0
  %234 = vmatpush1.msra.mxu0 %v175
  %235 = vmatprep.subr.mxu0 0.0
  %236 = vmatpush1.msra.mxu0 %v176
  %237 = vmatprep.subr.mxu0 0.0
  %238 = vmatpush1.msra.mxu0 %v177
  %239 = vmatprep.subr.mxu0 0.0
  %240 = vmatpush1.msra.mxu0 %v178
  %241 = vmatprep.subr.mxu0 0.0
  %242 = vmatpush1.msra.mxu0 %v179
  %243 = vmatprep.subr.mxu0 0.0
  %244 = vmatpush1.msra.mxu0 %v180
  %245 = vmatprep.subr.mxu0 0.0
  %246 = vmatpush1.msra.mxu0 %v181
  %247 = vmatprep.subr.mxu0 0.0
  %248 = vmatpush1.msra.mxu0 %v182
  %249 = vmatprep.subr.mxu0 0.0
  %250 = vmatpush1.msra.mxu0 %v183
  %251 = vmatprep.subr.mxu0 0.0
  %252 = vmatpush1.msra.mxu0 %v184
  %253 = vmatprep.subr.mxu0 0.0
  %254 = vmatpush1.msra.mxu0 %v185
  %255 = vmatprep.subr.mxu0 0.0
  %256 = vmatpush1.msra.mxu0 %v186
  %257 = vmatprep.subr.mxu0 0.0
  %258 = vmatpush1.msra.mxu0 %v187
  %259 = vmatprep.subr.mxu0 0.0
  %260 = vmatpush1.msra.mxu0 %v188
  %261 = vmatprep.subr.mxu0 0.0
  %262 = vmatpush1.msra.mxu0 %v189
  %263 = vmatprep.subr.mxu0 0.0
  %264 = vmatpush1.msra.mxu0 %v190
  %265 = vmatprep.subr.mxu0 0.0
  %266 = vmatpush1.msra.mxu0 %v191
  %267 = vmatprep.subr.mxu0 0.0
  %268 = vmatpush1.msra.mxu0 %v192
  %269 = vmatprep.subr.mxu0 0.0
  %270 = vmatpush1.msra.mxu0 %v193
  %271 = vmatprep.subr.mxu0 0.0
  %272 = vmatpush1.msra.mxu0 %v194
  %273 = vmatprep.subr.mxu0 0.0
  %274 = vmatpush1.msra.mxu0 %v195
  %275 = vmatprep.subr.mxu0 0.0
  %276 = vmatpush1.msra.mxu0 %v196
  %277 = vmatprep.subr.mxu0 0.0
  %278 = vmatpush1.msra.mxu0 %v197
  %279 = vmatprep.subr.mxu0 0.0
  %280 = vmatpush1.msra.mxu0 %v198
  %281 = vmatprep.subr.mxu0 0.0
  %282 = vmatpush1.msra.mxu0 %v199
  %283 = vmatprep.subr.mxu0 0.0
  %284 = vmatpush1.msra.mxu0 %v200
  %285 = vmatprep.subr.mxu0 0.0
  %286 = vmatpush1.msra.mxu0 %v201
  %287 = vmatprep.subr.mxu0 0.0
  %288 = vmatpush1.msra.mxu0 %v202
  %289 = vmatprep.subr.mxu0 0.0
  %290 = vmatpush1.msra.mxu0 %v203
  %291 = vmatprep.mubr.f32.mxu0 %v148
  %292 = vmatmul.mubr.f32.gmra.mrb[0].mxu0 %v168
  %v293 = vpop.f32.mrb[0].mxu0
  %v294 = vadd.f32 %v225, %v293
  %v295 = vpop.f32.mrb[0].mxu0
  %296 = vmatprep.mubr.f32.mxu0 %v149
  %297 = vmatmul.mubr.f32.gmra.mrb[0].mxu0 %v169
  %v298 = vpop.f32.mrb[0].mxu0
  %v299 = vadd.f32 %v225, %v298
  %v300 = vpop.f32.mrb[0].mxu0
  %301 = vdwg.mxu0
  %302 = vmatprep.subr.mxu0 0.0
  %303 = vmatpush1.msra.mxu0 %v204
  %304 = vmatprep.subr.mxu0 0.0
  %305 = vmatpush1.msra.mxu0 %v205
  %306 = vmatprep.subr.mxu0 0.0
  %307 = vmatpush1.msra.mxu0 %v206
  %308 = vmatprep.subr.mxu0 0.0
  %309 = vmatpush1.msra.mxu0 %v207
  %310 = vmatprep.subr.mxu0 0.0
  %311 = vmatpush1.msra.mxu0 %v208
  %312 = vmatprep.subr.mxu0 0.0
  %313 = vmatpush1.msra.mxu0 %v209
  %314 = vmatprep.subr.mxu0 0.0
  %315 = vmatpush1.msra.mxu0 %v210
  %316 = vmatprep.subr.mxu0 0.0
  %317 = vmatpush1.msra.mxu0 %v211
  %318 = vmatprep.subr.mxu0 0.0
  %319 = vmatpush1.msra.mxu0 %v212
  %320 = vmatprep.subr.mxu0 0.0
  %321 = vmatpush1.msra.mxu0 %v213
  %322 = vmatprep.subr.mxu0 0.0
  %323 = vmatpush1.msra.mxu0 %v214
  %324 = vmatprep.subr.mxu0 0.0
  %325 = vmatpush1.msra.mxu0 %v215
  %326 = vmatprep.subr.mxu0 0.0
  %327 = vmatpush1.msra.mxu0 %v216
  %328 = vmatprep.subr.mxu0 0.0
  %329 = vmatpush1.msra.mxu0 %v217
  %330 = vmatprep.subr.mxu0 0.0
  %331 = vmatpush1.msra.mxu0 %v218
  %332 = vmatprep.subr.mxu0 0.0
  %333 = vmatpush1.msra.mxu0 %v219
  %334 = vmatprep.subr.mxu0 0.0
  %335 = vmatpush1.msra.mxu0 0.0
  %336 = vmatprep.subr.mxu0 0.0
  %337 = vmatpush1.msra.mxu0 0.0
  %338 = vmatprep.subr.mxu0 0.0
  %339 = vmatpush1.msra.mxu0 0.0
  %340 = vmatprep.subr.mxu0 0.0
  %341 = vmatpush1.msra.mxu0 0.0
  %342 = vmatprep.subr.mxu0 0.0
  %343 = vmatpush1.msra.mxu0 0.0
  %344 = vmatprep.subr.mxu0 0.0
  %345 = vmatpush1.msra.mxu0 0.0
  %346 = vmatprep.subr.mxu0 0.0
  %347 = vmatpush1.msra.mxu0 0.0
  %348 = vmatprep.subr.mxu0 0.0
  %349 = vmatpush1.msra.mxu0 0.0
  %350 = vmatprep.subr.mxu0 0.0
  %351 = vmatpush1.msra.mxu0 0.0
  %352 = vmatprep.subr.mxu0 0.0
  %353 = vmatpush1.msra.mxu0 0.0
  %354 = vmatprep.subr.mxu0 0.0
  %355 = vmatpush1.msra.mxu0 0.0
  %356 = vmatprep.subr.mxu0 0.0
  %357 = vmatpush1.msra.mxu0 0.0
  %358 = vmatprep.subr.mxu0 0.0
  %359 = vmatpush1.msra.mxu0 0.0
  %360 = vmatprep.subr.mxu0 0.0
  %361 = vmatpush1.msra.mxu0 0.0
  %362 = vmatprep.subr.mxu0 0.0
  %363 = vmatpush1.msra.mxu0 0.0
  %364 = vmatprep.subr.mxu0 0.0
  %365 = vmatpush1.msra.mxu0 0.0
  %366 = vmatprep.mubr.f32.mxu0 0.0
  %367 = vmatmul.mubr.f32.gmra.mrb[0].mxu0 %v170
  %v368 = vpop.f32.mrb[0].mxu0
  %v369 = vadd.f32 %v294, %v368
  %v370 = vpop.f32.mrb[0].mxu0
  %371 = vmatprep.mubr.f32.mxu0 0.0
  %372 = vmatmul.mubr.f32.gmra.mrb[0].mxu0 %v171
  %v373 = vpop.f32.mrb[0].mxu0
  %v374 = vadd.f32 %v299, %v373
  %v375 = vpop.f32.mrb[0].mxu0
  %376 = vdwg.mxu0
  %377 = vst [vmem:[%s5] sm:$0xff] %v369
  %378 = vst [vmem:[%s5 + $0x18] sm:$0xff] %v374
  %v379 = vld [vmem:[%s0] sm:$0xff]
  %v380 = vld [vmem:[%s0 + $0x10] sm:$0xff]
  %s381 = scalar_lea.vmem %s1, 48
  %v382 = vld [vmem:[%s381] sm:$0xff]
  %v383 = vld [vmem:[%s381 + $0x8] sm:$0xff]
  %v384 = vld [vmem:[%s381 + $0x10] sm:$0xff]
  %v385 = vld [vmem:[%s381 + $0x18] sm:$0xff]
  %v386 = vld [vmem:[%s381 + $0x20] sm:$0xff]
  %v387 = vld [vmem:[%s381 + $0x28] sm:$0xff]
  %s388 = scalar_lea.vmem %s2, 1
  %v389 = vld [vmem:[%s388] sm:$0x1]
  %v391 = vlaneseq
  %v392 = vshrl.u32 %v391, 7
  %v393 = vsub.s32 0, %v392
  %v394 = vrot.slane %v389, %v393
  %398 = vrot.lane.b32.xlu0 %v379, 80
  %v399 = vpop.permute.xlu0 %398
  %400 = vrot.lane.b32.xlu0 %v380, 80
  %v401 = vpop.permute.xlu0 %400
  %v402 = vsel %vm66, %v399, 0
  %v404 = vsel %vm66, %v401, 0
  %406 = vmatprep.subr.mxu0 0.0
  %407 = vmatpush1.msra.mxu0 %v382
  %408 = vmatprep.subr.mxu0 0.0
  %409 = vmatpush1.msra.mxu0 %v383
  %410 = vmatprep.subr.mxu0 0.0
  %411 = vmatpush1.msra.mxu0 %v384
  %412 = vmatprep.subr.mxu0 0.0
  %413 = vmatpush1.msra.mxu0 %v385
  %414 = vmatprep.subr.mxu0 0.0
  %415 = vmatpush1.msra.mxu0 %v386
  %416 = vmatprep.subr.mxu0 0.0
  %417 = vmatpush1.msra.mxu0 %v387
  %418 = vmatprep.subr.mxu0 0.0
  %419 = vmatpush1.msra.mxu0 0.0
  %420 = vmatprep.subr.mxu0 0.0
  %421 = vmatpush1.msra.mxu0 0.0
  %422 = vmatprep.subr.mxu0 0.0
  %423 = vmatpush1.msra.mxu0 0.0
  %424 = vmatprep.subr.mxu0 0.0
  %425 = vmatpush1.msra.mxu0 0.0
  %426 = vmatprep.subr.mxu0 0.0
  %427 = vmatpush1.msra.mxu0 0.0
  %428 = vmatprep.subr.mxu0 0.0
  %429 = vmatpush1.msra.mxu0 0.0
  %430 = vmatprep.subr.mxu0 0.0
  %431 = vmatpush1.msra.mxu0 0.0
  %432 = vmatprep.subr.mxu0 0.0
  %433 = vmatpush1.msra.mxu0 0.0
  %434 = vmatprep.subr.mxu0 0.0
  %435 = vmatpush1.msra.mxu0 0.0
  %436 = vmatprep.subr.mxu0 0.0
  %437 = vmatpush1.msra.mxu0 0.0
  %438 = vmatprep.subr.mxu0 0.0
  %439 = vmatpush1.msra.mxu0 0.0
  %440 = vmatprep.subr.mxu0 0.0
  %441 = vmatpush1.msra.mxu0 0.0
  %442 = vmatprep.subr.mxu0 0.0
  %443 = vmatpush1.msra.mxu0 0.0
  %444 = vmatprep.subr.mxu0 0.0
  %445 = vmatpush1.msra.mxu0 0.0
  %446 = vmatprep.subr.mxu0 0.0
  %447 = vmatpush1.msra.mxu0 0.0
  %448 = vmatprep.subr.mxu0 0.0
  %449 = vmatpush1.msra.mxu0 0.0
  %450 = vmatprep.subr.mxu0 0.0
  %451 = vmatpush1.msra.mxu0 0.0
  %452 = vmatprep.subr.mxu0 0.0
  %453 = vmatpush1.msra.mxu0 0.0
  %454 = vmatprep.subr.mxu0 0.0
  %455 = vmatpush1.msra.mxu0 0.0
  %456 = vmatprep.subr.mxu0 0.0
  %457 = vmatpush1.msra.mxu0 0.0
  %458 = vmatprep.subr.mxu0 0.0
  %459 = vmatpush1.msra.mxu0 0.0
  %460 = vmatprep.subr.mxu0 0.0
  %461 = vmatpush1.msra.mxu0 0.0
  %462 = vmatprep.subr.mxu0 0.0
  %463 = vmatpush1.msra.mxu0 0.0
  %464 = vmatprep.subr.mxu0 0.0
  %465 = vmatpush1.msra.mxu0 0.0
  %466 = vmatprep.subr.mxu0 0.0
  %467 = vmatpush1.msra.mxu0 0.0
  %468 = vmatprep.subr.mxu0 0.0
  %469 = vmatpush1.msra.mxu0 0.0
  %470 = vmatprep.mubr.f32.mxu0 0.0
  %471 = vmatmul.mubr.f32.gmra.mrb[0].mxu0 %v402
  %v472 = vpop.f32.mrb[0].mxu0
  %v473 = vadd.f32 %v394, %v472
  %v474 = vpop.f32.mrb[0].mxu0
  %475 = vmatprep.mubr.f32.mxu0 0.0
  %476 = vmatmul.mubr.f32.gmra.mrb[0].mxu0 %v404
  %v477 = vpop.f32.mrb[0].mxu0
  %v478 = vadd.f32 %v394, %v477
  %v479 = vpop.f32.mrb[0].mxu0
  %480 = vdwg.mxu0
  %v481 = vmax.f32 %v473, 0.0
  %v482 = vmax.f32 %v478, 0.0
  %v484 = vrot.slane %v482, 7
  %v487 = vrot.slane %v481, 7
  %v488 = vsel %vm154, %v487, %v484
  %v491 = vsel %vm154, %v484, %v487
  %v492 = vrot.slane %v481, 1
  %v493 = vrot.slane %v482, 1
  %v494 = vsel %vm160, %v492, %v493
  %v498 = vsel %vm160, %v493, %v492
  %v499 = vsel %vm47, %v494, %v491
  %v500 = vsel %vm48, %v498, %v488
  %v501 = vsel %vm49, %v491, %v494
  %v502 = vsel %vm50, %v488, %v498
  %s503 = scalar_lea.vmem %s3, 384
  %v504 = vld [vmem:[%s503] sm:$0xff]
  %v505 = vld [vmem:[%s503 + $0x8] sm:$0xff]
  %v506 = vld [vmem:[%s503 + $0x10] sm:$0xff]
  %v507 = vld [vmem:[%s503 + $0x18] sm:$0xff]
  %v508 = vld [vmem:[%s503 + $0x20] sm:$0xff]
  %v509 = vld [vmem:[%s503 + $0x28] sm:$0xff]
  %v510 = vld [vmem:[%s503 + $0x30] sm:$0xff]
  %v511 = vld [vmem:[%s503 + $0x38] sm:$0xff]
  %v512 = vld [vmem:[%s503 + $0x40] sm:$0xff]
  %v513 = vld [vmem:[%s503 + $0x48] sm:$0xff]
  %v514 = vld [vmem:[%s503 + $0x50] sm:$0xff]
  %v515 = vld [vmem:[%s503 + $0x58] sm:$0xff]
  %v516 = vld [vmem:[%s503 + $0x60] sm:$0xff]
  %v517 = vld [vmem:[%s503 + $0x68] sm:$0xff]
  %v518 = vld [vmem:[%s503 + $0x70] sm:$0xff]
  %v519 = vld [vmem:[%s503 + $0x78] sm:$0xff]
  %v520 = vld [vmem:[%s503 + $0x80] sm:$0xff]
  %v521 = vld [vmem:[%s503 + $0x88] sm:$0xff]
  %v522 = vld [vmem:[%s503 + $0x90] sm:$0xff]
  %v523 = vld [vmem:[%s503 + $0x98] sm:$0xff]
  %v524 = vld [vmem:[%s503 + $0xa0] sm:$0xff]
  %v525 = vld [vmem:[%s503 + $0xa8] sm:$0xff]
  %v526 = vld [vmem:[%s503 + $0xb0] sm:$0xff]
  %v527 = vld [vmem:[%s503 + $0xb8] sm:$0xff]
  %v528 = vld [vmem:[%s503 + $0xc0] sm:$0xff]
  %v529 = vld [vmem:[%s503 + $0xc8] sm:$0xff]
  %v530 = vld [vmem:[%s503 + $0xd0] sm:$0xff]
  %v531 = vld [vmem:[%s503 + $0xd8] sm:$0xff]
  %v532 = vld [vmem:[%s503 + $0xe0] sm:$0xff]
  %v533 = vld [vmem:[%s503 + $0xe8] sm:$0xff]
  %v534 = vld [vmem:[%s503 + $0xf0] sm:$0xff]
  %v535 = vld [vmem:[%s503 + $0xf8] sm:$0xff]
  %v536 = vld [vmem:[%s503 + $0x100] sm:$0xff]
  %v537 = vld [vmem:[%s503 + $0x108] sm:$0xff]
  %v538 = vld [vmem:[%s503 + $0x110] sm:$0xff]
  %v539 = vld [vmem:[%s503 + $0x118] sm:$0xff]
  %v540 = vld [vmem:[%s503 + $0x120] sm:$0xff]
  %v541 = vld [vmem:[%s503 + $0x128] sm:$0xff]
  %v542 = vld [vmem:[%s503 + $0x130] sm:$0xff]
  %v543 = vld [vmem:[%s503 + $0x138] sm:$0xff]
  %v544 = vld [vmem:[%s503 + $0x140] sm:$0xff]
  %v545 = vld [vmem:[%s503 + $0x148] sm:$0xff]
  %v546 = vld [vmem:[%s503 + $0x150] sm:$0xff]
  %v547 = vld [vmem:[%s503 + $0x158] sm:$0xff]
  %v548 = vld [vmem:[%s503 + $0x160] sm:$0xff]
  %v549 = vld [vmem:[%s503 + $0x168] sm:$0xff]
  %v550 = vld [vmem:[%s503 + $0x170] sm:$0xff]
  %v551 = vld [vmem:[%s503 + $0x178] sm:$0xff]
  %s552 = scalar_lea.vmem %s4, 1
  %v553 = vld [vmem:[%s552] sm:$0x1]
  %v555 = vlaneseq
  %v556 = vshrl.u32 %v555, 7
  %v557 = vsub.s32 0, %v556
  %v558 = vrot.slane %v553, %v557
  %560 = vmatprep.subr.mxu0 0.0
  %561 = vmatpush1.msra.mxu0 %v504
  %562 = vmatprep.subr.mxu0 0.0
  %563 = vmatpush1.msra.mxu0 %v505
  %564 = vmatprep.subr.mxu0 0.0
  %565 = vmatpush1.msra.mxu0 %v506
  %566 = vmatprep.subr.mxu0 0.0
  %567 = vmatpush1.msra.mxu0 %v507
  %568 = vmatprep.subr.mxu0 0.0
  %569 = vmatpush1.msra.mxu0 %v508
  %570 = vmatprep.subr.mxu0 0.0
  %571 = vmatpush1.msra.mxu0 %v509
  %572 = vmatprep.subr.mxu0 0.0
  %573 = vmatpush1.msra.mxu0 %v510
  %574 = vmatprep.subr.mxu0 0.0
  %575 = vmatpush1.msra.mxu0 %v511
  %576 = vmatprep.subr.mxu0 0.0
  %577 = vmatpush1.msra.mxu0 %v512
  %578 = vmatprep.subr.mxu0 0.0
  %579 = vmatpush1.msra.mxu0 %v513
  %580 = vmatprep.subr.mxu0 0.0
  %581 = vmatpush1.msra.mxu0 %v514
  %582 = vmatprep.subr.mxu0 0.0
  %583 = vmatpush1.msra.mxu0 %v515
  %584 = vmatprep.subr.mxu0 0.0
  %585 = vmatpush1.msra.mxu0 %v516
  %586 = vmatprep.subr.mxu0 0.0
  %587 = vmatpush1.msra.mxu0 %v517
  %588 = vmatprep.subr.mxu0 0.0
  %589 = vmatpush1.msra.mxu0 %v518
  %590 = vmatprep.subr.mxu0 0.0
  %591 = vmatpush1.msra.mxu0 %v519
  %592 = vmatprep.subr.mxu0 0.0
  %593 = vmatpush1.msra.mxu0 %v520
  %594 = vmatprep.subr.mxu0 0.0
  %595 = vmatpush1.msra.mxu0 %v521
  %596 = vmatprep.subr.mxu0 0.0
  %597 = vmatpush1.msra.mxu0 %v522
  %598 = vmatprep.subr.mxu0 0.0
  %599 = vmatpush1.msra.mxu0 %v523
  %600 = vmatprep.subr.mxu0 0.0
  %601 = vmatpush1.msra.mxu0 %v524
  %602 = vmatprep.subr.mxu0 0.0
  %603 = vmatpush1.msra.mxu0 %v525
  %604 = vmatprep.subr.mxu0 0.0
  %605 = vmatpush1.msra.mxu0 %v526
  %606 = vmatprep.subr.mxu0 0.0
  %607 = vmatpush1.msra.mxu0 %v527
  %608 = vmatprep.subr.mxu0 0.0
  %609 = vmatpush1.msra.mxu0 %v528
  %610 = vmatprep.subr.mxu0 0.0
  %611 = vmatpush1.msra.mxu0 %v529
  %612 = vmatprep.subr.mxu0 0.0
  %613 = vmatpush1.msra.mxu0 %v530
  %614 = vmatprep.subr.mxu0 0.0
  %615 = vmatpush1.msra.mxu0 %v531
  %616 = vmatprep.subr.mxu0 0.0
  %617 = vmatpush1.msra.mxu0 %v532
  %618 = vmatprep.subr.mxu0 0.0
  %619 = vmatpush1.msra.mxu0 %v533
  %620 = vmatprep.subr.mxu0 0.0
  %621 = vmatpush1.msra.mxu0 %v534
  %622 = vmatprep.subr.mxu0 0.0
  %623 = vmatpush1.msra.mxu0 %v535
  %624 = vmatprep.mubr.f32.mxu0 %v481
  %625 = vmatmul.mubr.f32.gmra.mrb[0].mxu0 %v499
  %v626 = vpop.f32.mrb[0].mxu0
  %v627 = vadd.f32 %v558, %v626
  %v628 = vpop.f32.mrb[0].mxu0
  %629 = vmatprep.mubr.f32.mxu0 %v482
  %630 = vmatmul.mubr.f32.gmra.mrb[0].mxu0 %v500
  %v631 = vpop.f32.mrb[0].mxu0
  %v632 = vadd.f32 %v558, %v631
  %v633 = vpop.f32.mrb[0].mxu0
  %634 = vdwg.mxu0
  %635 = vmatprep.subr.mxu0 0.0
  %636 = vmatpush1.msra.mxu0 %v536
  %637 = vmatprep.subr.mxu0 0.0
  %638 = vmatpush1.msra.mxu0 %v537
  %639 = vmatprep.subr.mxu0 0.0
  %640 = vmatpush1.msra.mxu0 %v538
  %641 = vmatprep.subr.mxu0 0.0
  %642 = vmatpush1.msra.mxu0 %v539
  %643 = vmatprep.subr.mxu0 0.0
  %644 = vmatpush1.msra.mxu0 %v540
  %645 = vmatprep.subr.mxu0 0.0
  %646 = vmatpush1.msra.mxu0 %v541
  %647 = vmatprep.subr.mxu0 0.0
  %648 = vmatpush1.msra.mxu0 %v542
  %649 = vmatprep.subr.mxu0 0.0
  %650 = vmatpush1.msra.mxu0 %v543
  %651 = vmatprep.subr.mxu0 0.0
  %652 = vmatpush1.msra.mxu0 %v544
  %653 = vmatprep.subr.mxu0 0.0
  %654 = vmatpush1.msra.mxu0 %v545
  %655 = vmatprep.subr.mxu0 0.0
  %656 = vmatpush1.msra.mxu0 %v546
  %657 = vmatprep.subr.mxu0 0.0
  %658 = vmatpush1.msra.mxu0 %v547
  %659 = vmatprep.subr.mxu0 0.0
  %660 = vmatpush1.msra.mxu0 %v548
  %661 = vmatprep.subr.mxu0 0.0
  %662 = vmatpush1.msra.mxu0 %v549
  %663 = vmatprep.subr.mxu0 0.0
  %664 = vmatpush1.msra.mxu0 %v550
  %665 = vmatprep.subr.mxu0 0.0
  %666 = vmatpush1.msra.mxu0 %v551
  %667 = vmatprep.subr.mxu0 0.0
  %668 = vmatpush1.msra.mxu0 0.0
  %669 = vmatprep.subr.mxu0 0.0
  %670 = vmatpush1.msra.mxu0 0.0
  %671 = vmatprep.subr.mxu0 0.0
  %672 = vmatpush1.msra.mxu0 0.0
  %673 = vmatprep.subr.mxu0 0.0
  %674 = vmatpush1.msra.mxu0 0.0
  %675 = vmatprep.subr.mxu0 0.0
  %676 = vmatpush1.msra.mxu0 0.0
  %677 = vmatprep.subr.mxu0 0.0
  %678 = vmatpush1.msra.mxu0 0.0
  %679 = vmatprep.subr.mxu0 0.0
  %680 = vmatpush1.msra.mxu0 0.0
  %681 = vmatprep.subr.mxu0 0.0
  %682 = vmatpush1.msra.mxu0 0.0
  %683 = vmatprep.subr.mxu0 0.0
  %684 = vmatpush1.msra.mxu0 0.0
  %685 = vmatprep.subr.mxu0 0.0
  %686 = vmatpush1.msra.mxu0 0.0
  %687 = vmatprep.subr.mxu0 0.0
  %688 = vmatpush1.msra.mxu0 0.0
  %689 = vmatprep.subr.mxu0 0.0
  %690 = vmatpush1.msra.mxu0 0.0
  %691 = vmatprep.subr.mxu0 0.0
  %692 = vmatpush1.msra.mxu0 0.0
  %693 = vmatprep.subr.mxu0 0.0
  %694 = vmatpush1.msra.mxu0 0.0
  %695 = vmatprep.subr.mxu0 0.0
  %696 = vmatpush1.msra.mxu0 0.0
  %697 = vmatprep.subr.mxu0 0.0
  %698 = vmatpush1.msra.mxu0 0.0
  %699 = vmatprep.mubr.f32.mxu0 0.0
  %700 = vmatmul.mubr.f32.gmra.mrb[0].mxu0 %v501
  %v701 = vpop.f32.mrb[0].mxu0
  %v702 = vadd.f32 %v627, %v701
  %v703 = vpop.f32.mrb[0].mxu0
  %704 = vmatprep.mubr.f32.mxu0 0.0
  %705 = vmatmul.mubr.f32.gmra.mrb[0].mxu0 %v502
  %v706 = vpop.f32.mrb[0].mxu0
  %v707 = vadd.f32 %v632, %v706
  %v708 = vpop.f32.mrb[0].mxu0
  %709 = vdwg.mxu0
  %710 = vst [vmem:[%s5 + $0x8] sm:$0xff] %v702
  %711 = vst [vmem:[%s5 + $0x20] sm:$0xff] %v707
  %v712 = vld [vmem:[%s0] sm:$0xff]
  %v713 = vld [vmem:[%s0 + $0x8] sm:$0xff]
  %v714 = vld [vmem:[%s0 + $0x10] sm:$0xff]
  %v715 = vld [vmem:[%s0 + $0x18] sm:$0xff]
  %s716 = scalar_lea.vmem %s1, 96
  %v717 = vld [vmem:[%s716] sm:$0xff]
  %v718 = vld [vmem:[%s716 + $0x8] sm:$0xff]
  %v719 = vld [vmem:[%s716 + $0x10] sm:$0xff]
  %v720 = vld [vmem:[%s716 + $0x18] sm:$0xff]
  %v721 = vld [vmem:[%s716 + $0x20] sm:$0xff]
  %v722 = vld [vmem:[%s716 + $0x28] sm:$0xff]
  %s723 = scalar_lea.vmem %s2, 2
  %v724 = vld [vmem:[%s723] sm:$0x1]
  %v726 = vlaneseq
  %v727 = vshrl.u32 %v726, 7
  %v728 = vsub.s32 0, %v727
  %v729 = vrot.slane %v724, %v728
  %735 = vrot.lane.b32.xlu0 %v712, 32
  %v736 = vpop.permute.xlu0 %735
  %737 = vrot.lane.b32.xlu0 %v713, 32
  %v738 = vpop.permute.xlu0 %737
  %739 = vrot.lane.b32.xlu0 %v714, 32
  %v740 = vpop.permute.xlu0 %739
  %741 = vrot.lane.b32.xlu0 %v715, 32
  %v742 = vpop.permute.xlu0 %741
  %vm743 = vcmask 261120
  %v744 = vsel %vm743, %v736, %v738
  %v745 = vsel %vm743, %v740, %v742
  %v746 = vsel %vm66, %v744, 0
  %v748 = vsel %vm66, %v745, 0
  %750 = vmatprep.subr.mxu0 0.0
  %751 = vmatpush1.msra.mxu0 %v717
  %752 = vmatprep.subr.mxu0 0.0
  %753 = vmatpush1.msra.mxu0 %v718
  %754 = vmatprep.subr.mxu0 0.0
  %755 = vmatpush1.msra.mxu0 %v719
  %756 = vmatprep.subr.mxu0 0.0
  %757 = vmatpush1.msra.mxu0 %v720
  %758 = vmatprep.subr.mxu0 0.0
  %759 = vmatpush1.msra.mxu0 %v721
  %760 = vmatprep.subr.mxu0 0.0
  %761 = vmatpush1.msra.mxu0 %v722
  %762 = vmatprep.subr.mxu0 0.0
  %763 = vmatpush1.msra.mxu0 0.0
  %764 = vmatprep.subr.mxu0 0.0
  %765 = vmatpush1.msra.mxu0 0.0
  %766 = vmatprep.subr.mxu0 0.0
  %767 = vmatpush1.msra.mxu0 0.0
  %768 = vmatprep.subr.mxu0 0.0
  %769 = vmatpush1.msra.mxu0 0.0
  %770 = vmatprep.subr.mxu0 0.0
  %771 = vmatpush1.msra.mxu0 0.0
  %772 = vmatprep.subr.mxu0 0.0
  %773 = vmatpush1.msra.mxu0 0.0
  %774 = vmatprep.subr.mxu0 0.0
  %775 = vmatpush1.msra.mxu0 0.0
  %776 = vmatprep.subr.mxu0 0.0
  %777 = vmatpush1.msra.mxu0 0.0
  %778 = vmatprep.subr.mxu0 0.0
  %779 = vmatpush1.msra.mxu0 0.0
  %780 = vmatprep.subr.mxu0 0.0
  %781 = vmatpush1.msra.mxu0 0.0
  %782 = vmatprep.subr.mxu0 0.0
  %783 = vmatpush1.msra.mxu0 0.0
  %784 = vmatprep.subr.mxu0 0.0
  %785 = vmatpush1.msra.mxu0 0.0
  %786 = vmatprep.subr.mxu0 0.0
  %787 = vmatpush1.msra.mxu0 0.0
  %788 = vmatprep.subr.mxu0 0.0
  %789 = vmatpush1.msra.mxu0 0.0
  %790 = vmatprep.subr.mxu0 0.0
  %791 = vmatpush1.msra.mxu0 0.0
  %792 = vmatprep.subr.mxu0 0.0
  %793 = vmatpush1.msra.mxu0 0.0
  %794 = vmatprep.subr.mxu0 0.0
  %795 = vmatpush1.msra.mxu0 0.0
  %796 = vmatprep.subr.mxu0 0.0
  %797 = vmatpush1.msra.mxu0 0.0
  %798 = vmatprep.subr.mxu0 0.0
  %799 = vmatpush1.msra.mxu0 0.0
  %800 = vmatprep.subr.mxu0 0.0
  %801 = vmatpush1.msra.mxu0 0.0
  %802 = vmatprep.subr.mxu0 0.0
  %803 = vmatpush1.msra.mxu0 0.0
  %804 = vmatprep.subr.mxu0 0.0
  %805 = vmatpush1.msra.mxu0 0.0
  %806 = vmatprep.subr.mxu0 0.0
  %807 = vmatpush1.msra.mxu0 0.0
  %808 = vmatprep.subr.mxu0 0.0
  %809 = vmatpush1.msra.mxu0 0.0
  %810 = vmatprep.subr.mxu0 0.0
  %811 = vmatpush1.msra.mxu0 0.0
  %812 = vmatprep.subr.mxu0 0.0
  %813 = vmatpush1.msra.mxu0 0.0
  %814 = vmatprep.mubr.f32.mxu0 0.0
  %815 = vmatmul.mubr.f32.gmra.mrb[0].mxu0 %v746
  %v816 = vpop.f32.mrb[0].mxu0
  %v817 = vadd.f32 %v729, %v816
  %v818 = vpop.f32.mrb[0].mxu0
  %819 = vmatprep.mubr.f32.mxu0 0.0
  %820 = vmatmul.mubr.f32.gmra.mrb[0].mxu0 %v748
  %v821 = vpop.f32.mrb[0].mxu0
  %v822 = vadd.f32 %v729, %v821
  %v823 = vpop.f32.mrb[0].mxu0
  %824 = vdwg.mxu0
  %v825 = vmax.f32 %v817, 0.0
  %v826 = vmax.f32 %v822, 0.0
  %v828 = vrot.slane %v826, 7
  %v831 = vrot.slane %v825, 7
  %v832 = vsel %vm154, %v831, %v828
  %v835 = vsel %vm154, %v828, %v831
  %v836 = vrot.slane %v825, 1
  %v837 = vrot.slane %v826, 1
  %v838 = vsel %vm160, %v836, %v837
  %v842 = vsel %vm160, %v837, %v836
  %v843 = vsel %vm47, %v838, %v835
  %v844 = vsel %vm48, %v842, %v832
  %v845 = vsel %vm49, %v835, %v838
  %v846 = vsel %vm50, %v832, %v842
  %s847 = scalar_lea.vmem %s3, 768
  %v848 = vld [vmem:[%s847] sm:$0xff]
  %v849 = vld [vmem:[%s847 + $0x8] sm:$0xff]
  %v850 = vld [vmem:[%s847 + $0x10] sm:$0xff]
  %v851 = vld [vmem:[%s847 + $0x18] sm:$0xff]
  %v852 = vld [vmem:[%s847 + $0x20] sm:$0xff]
  %v853 = vld [vmem:[%s847 + $0x28] sm:$0xff]
  %v854 = vld [vmem:[%s847 + $0x30] sm:$0xff]
  %v855 = vld [vmem:[%s847 + $0x38] sm:$0xff]
  %v856 = vld [vmem:[%s847 + $0x40] sm:$0xff]
  %v857 = vld [vmem:[%s847 + $0x48] sm:$0xff]
  %v858 = vld [vmem:[%s847 + $0x50] sm:$0xff]
  %v859 = vld [vmem:[%s847 + $0x58] sm:$0xff]
  %v860 = vld [vmem:[%s847 + $0x60] sm:$0xff]
  %v861 = vld [vmem:[%s847 + $0x68] sm:$0xff]
  %v862 = vld [vmem:[%s847 + $0x70] sm:$0xff]
  %v863 = vld [vmem:[%s847 + $0x78] sm:$0xff]
  %v864 = vld [vmem:[%s847 + $0x80] sm:$0xff]
  %v865 = vld [vmem:[%s847 + $0x88] sm:$0xff]
  %v866 = vld [vmem:[%s847 + $0x90] sm:$0xff]
  %v867 = vld [vmem:[%s847 + $0x98] sm:$0xff]
  %v868 = vld [vmem:[%s847 + $0xa0] sm:$0xff]
  %v869 = vld [vmem:[%s847 + $0xa8] sm:$0xff]
  %v870 = vld [vmem:[%s847 + $0xb0] sm:$0xff]
  %v871 = vld [vmem:[%s847 + $0xb8] sm:$0xff]
  %v872 = vld [vmem:[%s847 + $0xc0] sm:$0xff]
  %v873 = vld [vmem:[%s847 + $0xc8] sm:$0xff]
  %v874 = vld [vmem:[%s847 + $0xd0] sm:$0xff]
  %v875 = vld [vmem:[%s847 + $0xd8] sm:$0xff]
  %v876 = vld [vmem:[%s847 + $0xe0] sm:$0xff]
  %v877 = vld [vmem:[%s847 + $0xe8] sm:$0xff]
  %v878 = vld [vmem:[%s847 + $0xf0] sm:$0xff]
  %v879 = vld [vmem:[%s847 + $0xf8] sm:$0xff]
  %v880 = vld [vmem:[%s847 + $0x100] sm:$0xff]
  %v881 = vld [vmem:[%s847 + $0x108] sm:$0xff]
  %v882 = vld [vmem:[%s847 + $0x110] sm:$0xff]
  %v883 = vld [vmem:[%s847 + $0x118] sm:$0xff]
  %v884 = vld [vmem:[%s847 + $0x120] sm:$0xff]
  %v885 = vld [vmem:[%s847 + $0x128] sm:$0xff]
  %v886 = vld [vmem:[%s847 + $0x130] sm:$0xff]
  %v887 = vld [vmem:[%s847 + $0x138] sm:$0xff]
  %v888 = vld [vmem:[%s847 + $0x140] sm:$0xff]
  %v889 = vld [vmem:[%s847 + $0x148] sm:$0xff]
  %v890 = vld [vmem:[%s847 + $0x150] sm:$0xff]
  %v891 = vld [vmem:[%s847 + $0x158] sm:$0xff]
  %v892 = vld [vmem:[%s847 + $0x160] sm:$0xff]
  %v893 = vld [vmem:[%s847 + $0x168] sm:$0xff]
  %v894 = vld [vmem:[%s847 + $0x170] sm:$0xff]
  %v895 = vld [vmem:[%s847 + $0x178] sm:$0xff]
  %s896 = scalar_lea.vmem %s4, 2
  %v897 = vld [vmem:[%s896] sm:$0x1]
  %v899 = vlaneseq
  %v900 = vshrl.u32 %v899, 7
  %v901 = vsub.s32 0, %v900
  %v902 = vrot.slane %v897, %v901
  %904 = vmatprep.subr.mxu0 0.0
  %905 = vmatpush1.msra.mxu0 %v848
  %906 = vmatprep.subr.mxu0 0.0
  %907 = vmatpush1.msra.mxu0 %v849
  %908 = vmatprep.subr.mxu0 0.0
  %909 = vmatpush1.msra.mxu0 %v850
  %910 = vmatprep.subr.mxu0 0.0
  %911 = vmatpush1.msra.mxu0 %v851
  %912 = vmatprep.subr.mxu0 0.0
  %913 = vmatpush1.msra.mxu0 %v852
  %914 = vmatprep.subr.mxu0 0.0
  %915 = vmatpush1.msra.mxu0 %v853
  %916 = vmatprep.subr.mxu0 0.0
  %917 = vmatpush1.msra.mxu0 %v854
  %918 = vmatprep.subr.mxu0 0.0
  %919 = vmatpush1.msra.mxu0 %v855
  %920 = vmatprep.subr.mxu0 0.0
  %921 = vmatpush1.msra.mxu0 %v856
  %922 = vmatprep.subr.mxu0 0.0
  %923 = vmatpush1.msra.mxu0 %v857
  %924 = vmatprep.subr.mxu0 0.0
  %925 = vmatpush1.msra.mxu0 %v858
  %926 = vmatprep.subr.mxu0 0.0
  %927 = vmatpush1.msra.mxu0 %v859
  %928 = vmatprep.subr.mxu0 0.0
  %929 = vmatpush1.msra.mxu0 %v860
  %930 = vmatprep.subr.mxu0 0.0
  %931 = vmatpush1.msra.mxu0 %v861
  %932 = vmatprep.subr.mxu0 0.0
  %933 = vmatpush1.msra.mxu0 %v862
  %934 = vmatprep.subr.mxu0 0.0
  %935 = vmatpush1.msra.mxu0 %v863
  %936 = vmatprep.subr.mxu0 0.0
  %937 = vmatpush1.msra.mxu0 %v864
  %938 = vmatprep.subr.mxu0 0.0
  %939 = vmatpush1.msra.mxu0 %v865
  %940 = vmatprep.subr.mxu0 0.0
  %941 = vmatpush1.msra.mxu0 %v866
  %942 = vmatprep.subr.mxu0 0.0
  %943 = vmatpush1.msra.mxu0 %v867
  %944 = vmatprep.subr.mxu0 0.0
  %945 = vmatpush1.msra.mxu0 %v868
  %946 = vmatprep.subr.mxu0 0.0
  %947 = vmatpush1.msra.mxu0 %v869
  %948 = vmatprep.subr.mxu0 0.0
  %949 = vmatpush1.msra.mxu0 %v870
  %950 = vmatprep.subr.mxu0 0.0
  %951 = vmatpush1.msra.mxu0 %v871
  %952 = vmatprep.subr.mxu0 0.0
  %953 = vmatpush1.msra.mxu0 %v872
  %954 = vmatprep.subr.mxu0 0.0
  %955 = vmatpush1.msra.mxu0 %v873
  %956 = vmatprep.subr.mxu0 0.0
  %957 = vmatpush1.msra.mxu0 %v874
  %958 = vmatprep.subr.mxu0 0.0
  %959 = vmatpush1.msra.mxu0 %v875
  %960 = vmatprep.subr.mxu0 0.0
  %961 = vmatpush1.msra.mxu0 %v876
  %962 = vmatprep.subr.mxu0 0.0
  %963 = vmatpush1.msra.mxu0 %v877
  %964 = vmatprep.subr.mxu0 0.0
  %965 = vmatpush1.msra.mxu0 %v878
  %966 = vmatprep.subr.mxu0 0.0
  %967 = vmatpush1.msra.mxu0 %v879
  %968 = vmatprep.mubr.f32.mxu0 %v825
  %969 = vmatmul.mubr.f32.gmra.mrb[0].mxu0 %v843
  %v970 = vpop.f32.mrb[0].mxu0
  %v971 = vadd.f32 %v902, %v970
  %v972 = vpop.f32.mrb[0].mxu0
  %973 = vmatprep.mubr.f32.mxu0 %v826
  %974 = vmatmul.mubr.f32.gmra.mrb[0].mxu0 %v844
  %v975 = vpop.f32.mrb[0].mxu0
  %v976 = vadd.f32 %v902, %v975
  %v977 = vpop.f32.mrb[0].mxu0
  %978 = vdwg.mxu0
  %979 = vmatprep.subr.mxu0 0.0
  %980 = vmatpush1.msra.mxu0 %v880
  %981 = vmatprep.subr.mxu0 0.0
  %982 = vmatpush1.msra.mxu0 %v881
  %983 = vmatprep.subr.mxu0 0.0
  %984 = vmatpush1.msra.mxu0 %v882
  %985 = vmatprep.subr.mxu0 0.0
  %986 = vmatpush1.msra.mxu0 %v883
  %987 = vmatprep.subr.mxu0 0.0
  %988 = vmatpush1.msra.mxu0 %v884
  %989 = vmatprep.subr.mxu0 0.0
  %990 = vmatpush1.msra.mxu0 %v885
  %991 = vmatprep.subr.mxu0 0.0
  %992 = vmatpush1.msra.mxu0 %v886
  %993 = vmatprep.subr.mxu0 0.0
  %994 = vmatpush1.msra.mxu0 %v887
  %995 = vmatprep.subr.mxu0 0.0
  %996 = vmatpush1.msra.mxu0 %v888
  %997 = vmatprep.subr.mxu0 0.0
  %998 = vmatpush1.msra.mxu0 %v889
  %999 = vmatprep.subr.mxu0 0.0
  %1000 = vmatpush1.msra.mxu0 %v890
  %1001 = vmatprep.subr.mxu0 0.0
  %1002 = vmatpush1.msra.mxu0 %v891
  %1003 = vmatprep.subr.mxu0 0.0
  %1004 = vmatpush1.msra.mxu0 %v892
  %1005 = vmatprep.subr.mxu0 0.0
  %1006 = vmatpush1.msra.mxu0 %v893
  %1007 = vmatprep.subr.mxu0 0.0
  %1008 = vmatpush1.msra.mxu0 %v894
  %1009 = vmatprep.subr.mxu0 0.0
  %1010 = vmatpush1.msra.mxu0 %v895
  %1011 = vmatprep.subr.mxu0 0.0
  %1012 = vmatpush1.msra.mxu0 0.0
  %1013 = vmatprep.subr.mxu0 0.0
  %1014 = vmatpush1.msra.mxu0 0.0
  %1015 = vmatprep.subr.mxu0 0.0
  %1016 = vmatpush1.msra.mxu0 0.0
  %1017 = vmatprep.subr.mxu0 0.0
  %1018 = vmatpush1.msra.mxu0 0.0
  %1019 = vmatprep.subr.mxu0 0.0
  %1020 = vmatpush1.msra.mxu0 0.0
  %1021 = vmatprep.subr.mxu0 0.0
  %1022 = vmatpush1.msra.mxu0 0.0
  %1023 = vmatprep.subr.mxu0 0.0
  %1024 = vmatpush1.msra.mxu0 0.0
  %1025 = vmatprep.subr.mxu0 0.0
  %1026 = vmatpush1.msra.mxu0 0.0
  %1027 = vmatprep.subr.mxu0 0.0
  %1028 = vmatpush1.msra.mxu0 0.0
  %1029 = vmatprep.subr.mxu0 0.0
  %1030 = vmatpush1.msra.mxu0 0.0
  %1031 = vmatprep.subr.mxu0 0.0
  %1032 = vmatpush1.msra.mxu0 0.0
  %1033 = vmatprep.subr.mxu0 0.0
  %1034 = vmatpush1.msra.mxu0 0.0
  %1035 = vmatprep.subr.mxu0 0.0
  %1036 = vmatpush1.msra.mxu0 0.0
  %1037 = vmatprep.subr.mxu0 0.0
  %1038 = vmatpush1.msra.mxu0 0.0
  %1039 = vmatprep.subr.mxu0 0.0
  %1040 = vmatpush1.msra.mxu0 0.0
  %1041 = vmatprep.subr.mxu0 0.0
  %1042 = vmatpush1.msra.mxu0 0.0
  %1043 = vmatprep.mubr.f32.mxu0 0.0
  %1044 = vmatmul.mubr.f32.gmra.mrb[0].mxu0 %v845
  %v1045 = vpop.f32.mrb[0].mxu0
  %v1046 = vadd.f32 %v971, %v1045
  %v1047 = vpop.f32.mrb[0].mxu0
  %1048 = vmatprep.mubr.f32.mxu0 0.0
  %1049 = vmatmul.mubr.f32.gmra.mrb[0].mxu0 %v846
  %v1050 = vpop.f32.mrb[0].mxu0
  %v1051 = vadd.f32 %v976, %v1050
  %v1052 = vpop.f32.mrb[0].mxu0
  %1053 = vdwg.mxu0
  %1054 = vst [vmem:[%s5 + $0x10] sm:$0xff] %v1046
  %1055 = vst [vmem:[%s5 + $0x28] sm:$0xff] %v1051
  // Predicated region
  $region22: #{restricted_conv_block_forward.1} parent=0 // pred_check
    _
  $region23: #{restricted_conv_block_forward.1} parent=0 // pred_check_branch
    %1057 = sbr.rel (0) target = $region25
  $region24: #{restricted_conv_block_forward.1} parent=0 // pred_region
    _
  $region25: #{restricted_conv_block_forward.1} parent=0 // pred_fallthru
    _
  // Predicated region
  $region26: #{restricted_conv_block_forward.1} parent=0 // pred_check
    _
  $region27: #{restricted_conv_block_forward.1} parent=0 // pred_check_branch
    %1059 = sbr.rel (0) target = $region29
  $region28: #{restricted_conv_block_forward.1} parent=0 // pred_region
    _
  $region29: #{restricted_conv_block_forward.1} parent=0 // pred_fallthru
    _

</llo_original>
